<compile_context>
chip_gen: v5e
topology: v5e:2x2
jax: 0.10.0
libtpu: 0.0.40
codegen_flags: <defaults>
</compile_context>

<pallas_src>
import functools
import math

import jax
import jax.numpy as jnp
from jax.experimental import pallas as pl
from jax.experimental.pallas import tpu as pltpu


_TARGET_BLOCK_BYTES = 2 * 1024 * 1024   # ~2 MiB per x block -> many pipelined steps
_SUBLANE = 8                            # minimum second-to-last block dim (f32)


def make_sinusoidal_pe(hidden_size: int, max_seq_length: int = 5000) -> jnp.ndarray:
    """Deterministic buffer setup (plain JAX glue, matches PyTorch __init__)."""
    position = jnp.arange(0, max_seq_length, dtype=jnp.float32)[:, None]        # [L, 1]
    div_term = jnp.exp(
        jnp.arange(0, hidden_size, 2, dtype=jnp.float32)
        * (-math.log(10000.0) / hidden_size)
    )                                                                            # [H/2]
    pe = jnp.zeros((max_seq_length, hidden_size), dtype=jnp.float32)
    pe = pe.at[:, 0::2].set(jnp.sin(position * div_term))
    pe = pe.at[:, 1::2].set(jnp.cos(position * div_term))
    return pe                                                                    # [L, H]


def _vmem_limits() -> tuple[int, int]:
    """(vmem_limit_bytes, pipelined-block-footprint budget) per TPU generation."""
    try:
        info = pltpu.get_tpu_info()
        phys = int(getattr(info, "vmem_capacity_bytes", 64 << 20))
    except Exception:
        phys = 64 << 20                     # conservative fallback (v7x per-core VMEM)
    vmem_limit = int(min(max(phys // 2, 16 << 20), 64 << 20))
    return vmem_limit, vmem_limit * 3 // 4


def _num_tensorcores() -> int:
    """Best-effort TensorCore count (v7x: 2, v5e/v6e: 1). Defaults to 1."""
    try:
        info = pltpu.get_tpu_info()
    except Exception:
        return 1
    for name in ("num_tensorcores", "tensorcore_count", "num_cores", "core_count"):
        v = getattr(info, name, None)
        if isinstance(v, int) and v > 0:
            return v
    return 1


def _bcast_add_kernel(x_ref, pe_ref, o_ref):
    # x: (tile_s, tile_b, H); pe: (tile_s, 1, H) -> implicit broadcast over batch.
    o_ref[...] = (x_ref[...] + pe_ref[...]).astype(o_ref.dtype)


def _flat_add_kernel(x_ref, pe_ref, o_ref, *, batch):
    # x: (tile_s, B*H); pe: (tile_s, H).  batch < 8 on this path, so the lane
    # concat is tiny and runs on VPU/XLU slots that are idle in an HBM-bound kernel.
    pe = pe_ref[...]
    pe_tiled = pe if batch == 1 else jnp.concatenate([pe] * batch, axis=-1)
    o_ref[...] = (x_ref[...] + pe_tiled).astype(o_ref.dtype)


def positional_encoding_forward(x: jnp.ndarray, pe: jnp.ndarray,
                                *, donate_x: bool = False) -> jnp.ndarray:
    """x: [S, B, H]; pe: [max_seq_length, H] -> [S, B, H] (PyTorch-promoted dtype)."""
    S, B, H = x.shape
    if S > pe.shape[0]:
        raise ValueError(f"seq_len {S} exceeds max_seq_length {pe.shape[0]}")

    pe_s = pe[:S]
    out_dtype = jnp.promote_types(x.dtype, pe_s.dtype)   # PyTorch: bf16 x + f32 pe -> f32
    x_bytes = jnp.dtype(x.dtype).itemsize
    o_bytes = jnp.dtype(out_dtype).itemsize
    p_bytes = jnp.dtype(pe_s.dtype).itemsize

    vmem_limit, budget = _vmem_limits()
    n_cores = _num_tensorcores()
    cost = pl.CostEstimate(
        flops=S * B * H,
        transcendentals=0,
        bytes_accessed=S * B * H * (x_bytes + o_bytes) + S * H * p_bytes,
    )
    alias = {0: 0} if (donate_x and out_dtype == jnp.dtype(x.dtype)) else {}

    # --------------------------------------------------------------------- #
    # Small-batch path (B < 8): collapse to a dense 2-D [S, B*H] view (free
    # trailing-dim reshape, no HBM pass) so vreg sublanes stay fully occupied.
    # --------------------------------------------------------------------- #
    if B < _SUBLANE:
        F = B * H
        x2 = x.reshape(S, F)                               # contiguous -> no data movement
        row = 2 * (F * (x_bytes + o_bytes) + H * p_bytes)  # double-buffered per-row bytes
        tile_s = max(1, min(S, _TARGET_BLOCK_BYTES // max(1, F * x_bytes)))
        tile_s = min(tile_s, max(1, budget // max(1, row)))
        if S <= _SUBLANE:
            tile_s = S                                     # block dim == full dim is legal
        else:
            tile_s = max(_SUBLANE, (tile_s // _SUBLANE) * _SUBLANE)
        grid = (pl.cdiv(S, tile_s),)

        out2 = pl.pallas_call(
            functools.partial(_flat_add_kernel, batch=B),
            out_shape=jax.ShapeDtypeStruct((S, F), out_dtype),
            grid_spec=pltpu.PrefetchScalarGridSpec(
                num_scalar_prefetch=0,
                grid=grid,
                in_specs=[
                    pl.BlockSpec((tile_s, F), lambda i: (i, 0)),
                    pl.BlockSpec((tile_s, H), lambda i: (i, 0)),
                ],
                out_specs=pl.BlockSpec((tile_s, F), lambda i: (i, 0)),
            ),
            compiler_params=pltpu.CompilerParams(
                dimension_semantics=("parallel",),
                vmem_limit_bytes=vmem_limit,
            ),
            cost_estimate=cost,
            input_output_aliases=alias,
        )(x2, pe_s)
        return out2.reshape(S, B, H)                       # free reshape back

    # --------------------------------------------------------------------- #
    # General path (B >= 8): natural [S, B, H] layout, pe block (tile_s, 1, H)
    # broadcasts over batch.  Batch axis is tiled too when a single sequence
    # row would blow the ~2-4 MiB block target / per-generation VMEM budget.
    # --------------------------------------------------------------------- #
    def footprint(ts, tb):          # double-buffered x + out + pe blocks
        return 2 * (ts * tb * H * (x_bytes + o_bytes) + ts * H * p_bytes)

    row_x = B * H * x_bytes
    if row_x <= 2 * _TARGET_BLOCK_BYTES:
        tile_b = B                                          # full batch per block (legal)
    else:
        tile_b = max(_SUBLANE,
                     (_TARGET_BLOCK_BYTES // max(1, H * x_bytes)) // _SUBLANE * _SUBLANE)
        tile_b = min(tile_b, B)
    while tile_b > _SUBLANE and footprint(1, tile_b) > budget:
        tile_b = max(_SUBLANE, ((tile_b // 2) // _SUBLANE) * _SUBLANE)

    tile_s = max(1, min(S, _TARGET_BLOCK_BYTES // max(1, tile_b * H * x_bytes)))
    while tile_s > 1 and footprint(tile_s, tile_b) > budget:
        tile_s = max(1, tile_s // 2)

    # Megacore: only force extra sequence splits if the chip actually has >1 TC
    # and there is enough work for the split to pay for its per-step overhead.
    min_steps = 2 * n_cores
    if (n_cores > 1
            and pl.cdiv(S, tile_s) * pl.cdiv(B, tile_b) < min_steps
            and S >= min_steps
            and S * row_x > 4 * _TARGET_BLOCK_BYTES):
        tile_s = max(1, min(tile_s, pl.cdiv(S, min_steps)))

    grid = (pl.cdiv(S, tile_s), pl.cdiv(B, tile_b))
    # NOTE: if profiling shows exposed output writeback at block boundaries,
    # out_specs can take pipeline_mode=pl.Buffered(3); blocks are small enough.
    out = pl.pallas_call(
        _bcast_add_kernel,
        out_shape=jax.ShapeDtypeStruct((S, B, H), out_dtype),
        grid_spec=pltpu.PrefetchScalarGridSpec(
            num_scalar_prefetch=0,
            grid=grid,
            in_specs=[
                pl.BlockSpec((tile_s, tile_b, H), lambda i, j: (i, j, 0)),
                pl.BlockSpec((tile_s, 1, H), lambda i, j: (i, 0, 0)),
            ],
            out_specs=pl.BlockSpec((tile_s, tile_b, H), lambda i, j: (i, j, 0)),
        ),
        compiler_params=pltpu.CompilerParams(
            dimension_semantics=("parallel", "parallel"),
            vmem_limit_bytes=vmem_limit,
        ),
        cost_estimate=cost,
        input_output_aliases=alias,
    )(x, pe_s[:, None, :])
    return out


if __name__ == "__main__":
    hidden_size = 32
    max_seq_length = 64
    seq_len = 8
    batch = 2

    key = jax.random.PRNGKey(0)
    x = jax.random.normal(key, (seq_len, batch, hidden_size), dtype=jnp.float32)
    pe = make_sinusoidal_pe(hidden_size, max_seq_length)

    out = positional_encoding_forward(x, pe)
    out = jax.block_until_ready(out)

    # Reference check in plain JAX (same semantics as the PyTorch forward).
    ref = x + pe[:seq_len][:, None, :]
    assert out.shape == (seq_len, batch, hidden_size)
    assert out.dtype == ref.dtype
    assert jnp.allclose(out, ref, atol=1e-6, rtol=1e-6), "mismatch vs reference"

    print("KERNEL_OK")
</pallas_src>

<mosaic_0001>
module attributes {stable_mosaic.version = 11 : i64} {
  func.func @_flat_add_kernel(%arg0: i32, %arg1: memref<8x64xf32, #tpu.memory_space<vmem>>, %arg2: memref<8x32xf32, #tpu.memory_space<vmem>>, %arg3: memref<8x64xf32, #tpu.memory_space<vmem>>) attributes {dimension_semantics = [#tpu.dimension_semantics<parallel>], iteration_bounds = array<i64: 1>, scalar_prefetch = 0 : i64, scratch_operands = 0 : i64, tpu.core_type = #tpu.core_type<tc>, window_params = [{transform_indices = @transform_0, window_bounds = array<i64: 8, 64>}, {transform_indices = @transform_1, window_bounds = array<i64: 8, 32>}, {transform_indices = @transform_2, window_bounds = array<i64: 8, 64>}]} {
    %c0 = arith.constant 0 : index
    %c0_0 = arith.constant 0 : index
    %0 = vector.load %arg2[%c0, %c0_0] : memref<8x32xf32, #tpu.memory_space<vmem>>, vector<8x32xf32>
    %1 = tpu.concatenate %0, %0 in 1 : vector<8x32xf32>, vector<8x32xf32> -> vector<8x64xf32>
    %c0_1 = arith.constant 0 : index
    %c0_2 = arith.constant 0 : index
    %2 = vector.load %arg1[%c0_1, %c0_2] : memref<8x64xf32, #tpu.memory_space<vmem>>, vector<8x64xf32>
    %3 = arith.addf %2, %1 : vector<8x64xf32>
    %c0_3 = arith.constant 0 : index
    %c0_4 = arith.constant 0 : index
    %4 = vector.load %arg3[%c0_3, %c0_4] : memref<8x64xf32, #tpu.memory_space<vmem>>, vector<8x64xf32>
    tpu.vector_store %arg3[%c0_3, %c0_4], %3 {strides = array<i32>} : memref<8x64xf32, #tpu.memory_space<vmem>>, vector<8x64xf32>,
    return
  }
  func.func @transform_0(%arg0: i32) -> (i32, i32) {
    %c0_i32 = arith.constant 0 : i32
    %c0_i32_0 = arith.constant 0 : i32
    return %arg0, %c0_i32 : i32, i32
  }
  func.func @transform_1(%arg0: i32) -> (i32, i32) {
    %c0_i32 = arith.constant 0 : i32
    %c0_i32_0 = arith.constant 0 : i32
    return %arg0, %c0_i32 : i32, i32
  }
  func.func @transform_2(%arg0: i32) -> (i32, i32) {
    %c0_i32 = arith.constant 0 : i32
    %c0_i32_0 = arith.constant 0 : i32
    return %arg0, %c0_i32 : i32, i32
  }
}

</mosaic_0001>

<llo_original>
// kernel: tpu_custom_call.1
$region0: #{tpu_custom_call.1}
  #allocation0 [shape = 'u32[]', space=smem, size = 0x4, offset = 0x4, fixed_abs, tag = 'smem constant byte address 0x4 - core index']
  #allocation1 [shape = 'u32[72,128]{1,0:T(1,128)}', space=vmem, size = 0x9000, scoped, tag = 'internal scratch']
  %s0 = inlined_call_operand.hbm [shape: f32[8,64], index: 0, kind: input, shape index: {}]
  %s1 = inlined_call_operand.hbm [shape: f32[8,32], index: 1, kind: input, shape index: {}]
  %s2 = inlined_call_operand.hbm [shape: f32[8,64], index: 2, kind: output, shape index: {}]
  %s3 = sld [smem:[#allocation0]]
  $region26: #{tpu_custom_call.1} parent=0
    _
  %s5 = ssub.s32 1, %s3
  %s6 = scalar_select 0, %s5, %s3
  $region1: #{tpu_custom_call.1} parent=0
    #allocation2 [shape = 'u8[4096]{0}', space=vmem, size = 0x1000, scoped, tag = 'input window, operand 0, single buffered']
    #allocation3 [shape = 's32[1]{0}', space=sflag, size = 0x4, scoped, tag = 'scoped memory for tpu_custom_call.1']
    #allocation4 [shape = 's32[1]{0}', space=sflag, size = 0x4, scoped, tag = 'scoped memory for tpu_custom_call.1']
    #allocation5 [shape = 'u8[4096]{0}', space=vmem, size = 0x1000, scoped, tag = 'input window, operand 1, single buffered']
    #allocation6 [shape = 's32[1]{0}', space=sflag, size = 0x4, scoped, tag = 'scoped memory for tpu_custom_call.1']
    #allocation7 [shape = 'u8[4096]{0}', space=vmem, size = 0x1000, scoped, tag = 'output window, operand 0, single buffered']
    %7 = vsyncpa [#allocation3], 0
    %8 = vsyncpa [#allocation6], 0
    %9 = vsyncpa [#allocation4], 0
    // Predicated region
    $region2: #{tpu_custom_call.1} parent=1 // pred_check
      _
    $region3: #{tpu_custom_call.1} parent=1 // pred_check_branch
      %11 = sbr.rel (0) target = $region5
    $region4: #{tpu_custom_call.1} parent=1 // pred_region
      %13 = vsyncadd [#allocation3], 0
      %s15 = sshll.u32 %s0, 4
      %s16 = int_to_ptr.hbm [resolvable:$true] %s15
      %s17 = sshll.u32 [#allocation2], 4
      %s18 = int_to_ptr.vmem [resolvable:$true] %s17
      %20 = dma.hbm_to_vmem [thread:$0]  %s16, 128, %s18, [#allocation3]
    $region5: #{tpu_custom_call.1} parent=1 // pred_fallthru
      _
    // Predicated region
    $region6: #{tpu_custom_call.1} parent=1 // pred_check
      _
    $region7: #{tpu_custom_call.1} parent=1 // pred_check_branch
      %22 = sbr.rel (0) target = $region9
    $region8: #{tpu_custom_call.1} parent=1 // pred_region
      %24 = vsyncadd [#allocation6], 0
      %s26 = sshll.u32 %s1, 4
      %s27 = int_to_ptr.hbm [resolvable:$true] %s26
      %s28 = sshll.u32 [#allocation5], 4
      %s29 = int_to_ptr.vmem [resolvable:$true] %s28
      %31 = dma.hbm_to_vmem [thread:$0]  %s27, 128, %s29, [#allocation6]
    $region9: #{tpu_custom_call.1} parent=1 // pred_fallthru
      _
    // Predicated region
    $region10: #{tpu_custom_call.1} parent=1 // pred_check
      _
    $region11: #{tpu_custom_call.1} parent=1 // pred_check_branch
      %33 = sbr.rel (0) target = $region13
    $region12: #{tpu_custom_call.1} parent=1 // pred_region
      %35 = dma.done [#allocation3], 128
    $region13: #{tpu_custom_call.1} parent=1 // pred_fallthru
      _
    // Predicated region
    $region14: #{tpu_custom_call.1} parent=1 // pred_check
      _
    $region15: #{tpu_custom_call.1} parent=1 // pred_check_branch
      %37 = sbr.rel (0) target = $region17
    $region16: #{tpu_custom_call.1} parent=1 // pred_region
      %39 = dma.done [#allocation6], 128
    $region17: #{tpu_custom_call.1} parent=1 // pred_fallthru
      _
    %v40 = vld [vmem:[#allocation5] sm:$0xff]
    %42 = vrot.lane.b32.xlu0 %v40, 32
    %v43 = vpop.permute.xlu0 %42
    %vm45 = vcmask 261120
    %v46 = vsel %vm45, %v40, %v43
    %v47 = vld [vmem:[#allocation2] sm:$0xff]
    %v48 = vadd.f32 %v47, %v46
    %vm49 = vcmask 523264
    %50 = vst.msk [vmem:[#allocation7] sm:$0xff] %vm49, %v48
    // Predicated region
    $region18: #{tpu_custom_call.1} parent=1 // pred_check
      _
    $region19: #{tpu_custom_call.1} parent=1 // pred_check_branch
      %52 = sbr.rel (0) target = $region21
    $region20: #{tpu_custom_call.1} parent=1 // pred_region
      %54 = vsyncadd [#allocation4], 0
      %s56 = sshll.u32 [#allocation7], 4
      %s57 = int_to_ptr.vmem [resolvable:$true] %s56
      %s58 = sshll.u32 %s2, 4
      %s59 = int_to_ptr.hbm [resolvable:$true] %s58
      %61 = dma.vmem_to_hbm [thread:$0]  %s57, 128, %s59, [#allocation4]
    $region21: #{tpu_custom_call.1} parent=1 // pred_fallthru
      _
    // Predicated region
    $region22: #{tpu_custom_call.1} parent=1 // pred_check
      _
    $region23: #{tpu_custom_call.1} parent=1 // pred_check_branch
      %63 = sbr.rel (0) target = $region25
    $region24: #{tpu_custom_call.1} parent=1 // pred_region
      %65 = dma.done [#allocation4], 128
    $region25: #{tpu_custom_call.1} parent=1 // pred_fallthru
      _
    %66 = vsyncpa [#allocation3], 1
    %67 = vsyncpa [#allocation6], 1
    %68 = vsyncpa [#allocation4], 1

</llo_original>
